<compile_context>
chip_gen: v7x
topology: tpu7x:2x2x1
jax: 0.10.0
libtpu: 0.0.40
codegen_flags: <defaults>
</compile_context>

<pallas_src>
import math

import jax
import jax.numpy as jnp
import numpy as np
from jax.experimental import pallas as pl
from jax.experimental.pallas import tpu as pltpu


def sinusoidal_pe_table(max_len: int, size: int, dtype=jnp.float32):
    """Builds the same table as the PyTorch module's registered `pe` buffer."""
    if size % 2 != 0:
        raise ValueError(
            "Cannot use sin/cos positional encoding with odd dim (got dim={:d})".format(size))
    position = jnp.arange(max_len, dtype=jnp.float32)[:, None]                  # (L, 1)
    div_term = jnp.exp(jnp.arange(0, size, 2, dtype=jnp.float32)
                       * (-(math.log(10000.0) / size)))                          # (size//2,)
    ang = position * div_term                                                    # (L, size//2)
    # interleave: pe[:, 0::2] = sin, pe[:, 1::2] = cos
    pe = jnp.stack([jnp.sin(ang), jnp.cos(ang)], axis=-1).reshape(max_len, size)
    return pe.astype(dtype)


def _pe_add_kernel(emb_ref, pe_ref, out_ref):
    # emb_ref/out_ref: (tb, tr, L); pe_ref: (tr, L) broadcast over the batch dim.
    # Compute in f32 (free filler — kernel is HBM-bandwidth bound), store in emb dtype.
    emb = emb_ref[...].astype(jnp.float32)
    pe = pe_ref[...].astype(jnp.float32)
    out_ref[...] = (emb + pe[None, :, :]).astype(out_ref.dtype)


# ~4 MiB per emb/out tile -> 2x emb + 2x out + 2x pe tiles <= ~24 MiB double-buffered.
_TILE_BYTES = 4 << 20


def positional_encoding(emb, pe_table):
    """emb: [B, S, D] ; pe_table: [max_len, D] (max_len >= S). Returns emb + pe[:S]."""
    B, S, D = emb.shape
    assert pe_table.shape[0] >= S and pe_table.shape[1] == D
    # Only the rows the kernel needs, stored in emb's dtype (halves bf16 HBM read).
    pe = pe_table[:S].astype(emb.dtype)
    itemsize = jnp.dtype(emb.dtype).itemsize

    # Lane-dense view of the trailing dims:
    if D % 128 == 0:
        R, L = S, D                    # natural layout already lane-aligned; no reshape
    elif (S * D) % 128 == 0:
        R, L = (S * D) // 128, 128     # fold (S, D) into 128-lane rows (contiguous bitcast)
    else:
        R, L = S, D                    # fallback: full-D lane blocks (masked stores, correct)
    emb_v = emb.reshape(B, R, L)
    pe_v = pe.reshape(R, L)

    # Fixed tile + cdiv grid (no divisor search; ragged last block handled by Pallas).
    row_bytes = L * itemsize
    tr = max(8, (_TILE_BYTES // row_bytes) // 8 * 8)   # sublane-aligned row tile
    if tr >= R:
        tr = R                                          # whole (R, L) slab per tile
        tb = max(1, min(B, _TILE_BYTES // max(1, R * row_bytes)))  # block batch instead
    else:
        tb = 1

    grid = (pl.cdiv(R, tr), pl.cdiv(B, tb))   # batch innermost -> pe block stays resident

    cost = pl.CostEstimate(
        flops=B * S * D,
        transcendentals=0,
        bytes_accessed=(2 * B * S * D + S * D) * itemsize,
    )

    out_v = pl.pallas_call(
        _pe_add_kernel,
        out_shape=jax.ShapeDtypeStruct((B, R, L), emb.dtype),
        grid=grid,
        in_specs=[
            pl.BlockSpec((tb, tr, L), lambda r, b: (b, r, 0)),   # emb tile
            pl.BlockSpec((tr, L), lambda r, b: (r, 0)),          # pe tile (batch-invariant)
        ],
        out_specs=pl.BlockSpec((tb, tr, L), lambda r, b: (b, r, 0)),
        compiler_params=pltpu.CompilerParams(
            dimension_semantics=("parallel", "parallel"),
            vmem_limit_bytes=32 << 20,
        ),
        cost_estimate=cost,
    )(emb_v, pe_v)
    return out_v.reshape(B, S, D)
    # Note: output dtype follows emb.dtype (PyTorch would promote fp16/bf16 emb + f32 pe
    # to f32); the add itself is done in f32 and then downcast.


if __name__ == "__main__":
    # Shapes implied by the module: batch=2, seq=8, size(model)=32 (even), default max_len.
    B, S, D = 2, 8, 32
    MAX_LEN = 200000

    key = jax.random.PRNGKey(0)
    emb = jax.random.normal(key, (B, S, D), dtype=jnp.float32)

    pe_table = sinusoidal_pe_table(MAX_LEN, D)

    out = positional_encoding(emb, pe_table)
    out = jax.block_until_ready(out)

    # Pure-JAX reference mirroring the PyTorch forward.
    ref = emb + pe_table[None, :S, :]
    np.testing.assert_allclose(np.asarray(out), np.asarray(ref), rtol=1e-6, atol=1e-6)

    print("KERNEL_OK")
</pallas_src>

<mosaic_0001>
module attributes {stable_mosaic.version = 11 : i64} {
  func.func @_pe_add_kernel(%arg0: i32, %arg1: i32, %arg2: memref<2x2x128xf32, #tpu.memory_space<vmem>>, %arg3: memref<2x128xf32, #tpu.memory_space<vmem>>, %arg4: memref<2x2x128xf32, #tpu.memory_space<vmem>>) attributes {dimension_semantics = [#tpu.dimension_semantics<parallel>, #tpu.dimension_semantics<parallel>], iteration_bounds = array<i64: 1, 1>, scalar_prefetch = 0 : i64, scratch_operands = 0 : i64, tpu.core_type = #tpu.core_type<tc>, window_params = [{transform_indices = @transform_0, window_bounds = array<i64: 2, 2, 128>}, {transform_indices = @transform_1, window_bounds = array<i64: 2, 128>}, {transform_indices = @transform_2, window_bounds = array<i64: 2, 2, 128>}]} {
    %c0 = arith.constant 0 : index
    %c0_0 = arith.constant 0 : index
    %c0_1 = arith.constant 0 : index
    %0 = vector.load %arg2[%c0, %c0_0, %c0_1] : memref<2x2x128xf32, #tpu.memory_space<vmem>>, vector<2x2x128xf32>
    %c0_2 = arith.constant 0 : index
    %c0_3 = arith.constant 0 : index
    %1 = vector.load %arg3[%c0_2, %c0_3] : memref<2x128xf32, #tpu.memory_space<vmem>>, vector<2x128xf32>
    %2 = vector.shape_cast %1 : vector<2x128xf32> to vector<1x2x128xf32>
    %3 = vector.broadcast %2 : vector<1x2x128xf32> to vector<2x2x128xf32>
    %4 = arith.addf %0, %3 : vector<2x2x128xf32>
    %c0_4 = arith.constant 0 : index
    %c0_5 = arith.constant 0 : index
    %c0_6 = arith.constant 0 : index
    %5 = vector.load %arg4[%c0_4, %c0_5, %c0_6] : memref<2x2x128xf32, #tpu.memory_space<vmem>>, vector<2x2x128xf32>
    tpu.vector_store %arg4[%c0_4, %c0_5, %c0_6], %4 {strides = array<i32>} : memref<2x2x128xf32, #tpu.memory_space<vmem>>, vector<2x2x128xf32>,
    return
  }
  func.func @transform_0(%arg0: i32, %arg1: i32) -> (i32, i32, i32) {
    %c0_i32 = arith.constant 0 : i32
    %c0_i32_0 = arith.constant 0 : i32
    return %arg1, %arg0, %c0_i32 : i32, i32, i32
  }
  func.func @transform_1(%arg0: i32, %arg1: i32) -> (i32, i32) {
    %c0_i32 = arith.constant 0 : i32
    %c0_i32_0 = arith.constant 0 : i32
    return %arg0, %c0_i32 : i32, i32
  }
  func.func @transform_2(%arg0: i32, %arg1: i32) -> (i32, i32, i32) {
    %c0_i32 = arith.constant 0 : i32
    %c0_i32_0 = arith.constant 0 : i32
    return %arg1, %arg0, %c0_i32 : i32, i32, i32
  }
}

</mosaic_0001>

<llo_original>
// kernel: tpu_custom_call.1
$region0: #{tpu_custom_call.1}
  #allocation0 [shape = 'u32[]', space=smem, size = 0x4, offset = 0x4, fixed_abs, tag = 'smem constant byte address 0x4 - core index']
  #allocation1 [shape = 'u32[144,128]{1,0:T(1,128)}', space=vmem, size = 0x12000, scoped, tag = 'internal scratch']
  %s0 = inlined_call_operand.hbm [shape: f32[2,2,128], index: 0, kind: input, shape index: {}]
  %s1 = inlined_call_operand.vmem [shape: f32[2,128], index: 1, kind: input, shape index: {}]
  %s2 = inlined_call_operand.hbm [shape: f32[2,2,128], index: 2, kind: output, shape index: {}]
  %s3 = sld [smem:[#allocation0]]
  $region22: #{tpu_custom_call.1} parent=0
    _
  %s5 = ssub.s32 1, %s3
  %s6 = scalar_select 0, %s5, %s3
  $region1: #{tpu_custom_call.1} parent=0
    #allocation2 [shape = 'u8[2048]{0}', space=vmem, size = 0x800, scoped, tag = 'input window, operand 0, single buffered']
    #allocation3 [shape = 's32[1]{0}', space=sflag, size = 0x4, scoped, tag = 'scoped memory for tpu_custom_call.1']
    #allocation4 [shape = 's32[1]{0}', space=sflag, size = 0x4, scoped, tag = 'scoped memory for tpu_custom_call.1']
    #allocation5 [shape = 'u8[2048]{0}', space=vmem, size = 0x800, scoped, tag = 'output window, operand 0, single buffered']
    %7 = vsyncpa [#allocation3], 0
    %8 = vsyncpa [#allocation4], 0
    // Predicated region
    $region2: #{tpu_custom_call.1} parent=1 // pred_check
      _
    $region3: #{tpu_custom_call.1} parent=1 // pred_check_branch
      %10 = sbr.rel (0) target = $region5
    $region4: #{tpu_custom_call.1} parent=1 // pred_region
      %s12 = ssub.s32 64, 64
      %13 = vsyncadd [#allocation3], %s12
      %s14 = sshll.u32 [#allocation2], 4
      %s15 = int_to_ptr.vmem [resolvable:$true] %s14
      %20 = dma.hbm_to_vmem [thread:$0]  %s0, 64, %s15, [#allocation3], 32, 32, 2
    $region5: #{tpu_custom_call.1} parent=1 // pred_fallthru
      _
    // Predicated region
    $region6: #{tpu_custom_call.1} parent=1 // pred_check
      _
    $region7: #{tpu_custom_call.1} parent=1 // pred_check_branch
      %22 = sbr.rel (0) target = $region9
    $region8: #{tpu_custom_call.1} parent=1 // pred_region
      _
    $region9: #{tpu_custom_call.1} parent=1 // pred_fallthru
      _
    // Predicated region
    $region10: #{tpu_custom_call.1} parent=1 // pred_check
      _
    $region11: #{tpu_custom_call.1} parent=1 // pred_check_branch
      %24 = sbr.rel (0) target = $region13
    $region12: #{tpu_custom_call.1} parent=1 // pred_region
      %25 = dma.done [#allocation3], 64
    $region13: #{tpu_custom_call.1} parent=1 // pred_fallthru
      _
    %v26 = vld [vmem:[#allocation2] sm:$0x3]
    %v27 = vld [vmem:[#allocation2 + $0x2] sm:$0x3]
    %v28 = vld [vmem:[%s1] sm:$0x3]
    %v29 = vadd.f32 %v26, %v28
    %v30 = vadd.f32 %v27, %v28
    %31 = vst [vmem:[#allocation5] sm:$0x3] %v29
    %32 = vst [vmem:[#allocation5 + $0x2] sm:$0x3] %v30
    // Predicated region
    $region14: #{tpu_custom_call.1} parent=1 // pred_check
      _
    $region15: #{tpu_custom_call.1} parent=1 // pred_check_branch
      %34 = sbr.rel (0) target = $region17
    $region16: #{tpu_custom_call.1} parent=1 // pred_region
      %s36 = ssub.s32 64, 64
      %37 = vsyncadd [#allocation4], %s36
      %s38 = sshll.u32 [#allocation5], 4
      %s39 = int_to_ptr.vmem [resolvable:$true] %s38
      %44 = dma.vmem_to_hbm [thread:$0]  %s39, 64, %s2, [#allocation4], 32, 32, 2
    $region17: #{tpu_custom_call.1} parent=1 // pred_fallthru
      _
    // Predicated region
    $region18: #{tpu_custom_call.1} parent=1 // pred_check
      _
    $region19: #{tpu_custom_call.1} parent=1 // pred_check_branch
      %46 = sbr.rel (0) target = $region21
    $region20: #{tpu_custom_call.1} parent=1 // pred_region
      %47 = dma.done [#allocation4], 64
    $region21: #{tpu_custom_call.1} parent=1 // pred_fallthru
      _
    %48 = vsyncpa [#allocation3], 1
    %49 = vsyncpa [#allocation4], 1

</llo_original>
